<compile_context>
chip_gen: v7x
topology: tpu7x:2x2x1
jax: 0.10.0
libtpu: 0.0.40
codegen_flags: <defaults>
</compile_context>

<pallas_src>
import functools

import jax
import jax.numpy as jnp
from jax.experimental import pallas as pl
from jax.experimental.pallas import tpu as pltpu


# ----------------------------- Pallas kernel -------------------------------


def _nb1d_kernel(
    x_ref,                         # (1, rows, L)   io dtype, rows = TG*H, L = P*C
    mask_ref,                      # (rows, 4)      f32: [up_1, dn_1, up_d, dn_d]
    dw1_w_ref, dw1_b_ref,          # (3, L), (1, L) f32
    pw1_w_ref, pw1_s_ref, pw1_b_ref,   # (L, L) matmul dtype, (1, L) f32, (1, L) f32
    dw2_w_ref, dw2_b_ref,          # (3, L), (1, L) f32
    pw2_w_ref, pw2_s_ref, pw2_b_ref,
    out_ref,                       # (1, rows, L)   io dtype
    *, dilated):
  x = x_ref[0].astype(jnp.float32)             # (rows, L)
  rows = x.shape[0]
  m = mask_ref[...]                            # load masks once per block
  mu1, md1 = m[:, 0:1], m[:, 1:2]
  mu2, md2 = m[:, 2:3], m[:, 3:4]

  def dw_conv3x1(a, w, b, d, m_up, m_dn):
    # out[h] = w0*a[h-d] + w1*a[h] + w2*a[h+d] + b, zeros outside [0, H).
    # Shifts are sublane rotations (XLU); wrap-around across tile / packed
    # column-group boundaries is killed by the f32 masks (VPU multiplies).
    up = pltpu.roll(a, d % rows, axis=0) * m_up       # a[h-d]
    dn = pltpu.roll(a, (-d) % rows, axis=0) * m_dn    # a[h+d]
    return w[0:1, :] * up + w[1:2, :] * a + w[2:3, :] * dn + b

  def pw_conv1x1(a, w_ref, s, b):
    # 1x1 conv == (rows, L) @ (L, L) on the MXU (block-diagonal over packed
    # columns); BN scale s and folded shift b applied in f32 after the matmul.
    acc = jnp.dot(a.astype(w_ref.dtype), w_ref[...],
                  preferred_element_type=jnp.float32)
    return acc * s + b

  y = jnp.maximum(dw_conv3x1(x, dw1_w_ref[...], dw1_b_ref[...], 1, mu1, md1), 0.0)
  y = jnp.maximum(pw_conv1x1(y, pw1_w_ref, pw1_s_ref[...], pw1_b_ref[...]), 0.0)
  y = jnp.maximum(dw_conv3x1(y, dw2_w_ref[...], dw2_b_ref[...], dilated, mu2, md2), 0.0)
  y = pw_conv1x1(y, pw2_w_ref, pw2_s_ref[...], pw2_b_ref[...])
  # Dropout2d skipped (p == 0); residual + ReLU in f32, stored in io dtype.
  out_ref[0] = jnp.maximum(y + x, 0.0).astype(out_ref.dtype)


# ------------------------------ configuration -------------------------------


def _default_config():
  """(max_tile_rows, vmem_limit_bytes) per TPU generation (safe fallback)."""
  kind = ""
  try:
    kind = jax.devices()[0].device_kind.lower()
  except Exception:  # pragma: no cover
    pass
  if ("v5" in kind) or ("v6" in kind):
    # 128 MiB physical VMEM: large tiles amortize the ~0.35us per-step cost.
    return 8192, 96 * 1024 * 1024
  # v7x (64 MiB VMEM per TensorCore) or unknown: conservative budget.
  return 4096, 44 * 1024 * 1024


def _choose_pack(C, W, N, max_pack=None, target_lanes=128):
  """Columns packed per 128-lane group: largest divisor of W with P*C <= 128."""
  cap = target_lanes // C if C < target_lanes else 1
  if max_pack is not None:
    cap = min(cap, max_pack)
  cap = max(1, min(cap, W))
  best = 1
  for p in range(1, cap + 1):
    if W % p == 0:
      best = p
  # Keep at least 2 grid steps available (v7x has 2 TensorCores; pipelining).
  if N * (W // best) < 2:
    for p in range(best - 1, 0, -1):
      if W % p == 0 and N * (W // p) >= 2:
        best = p
        break
  return best


def _choose_tile_g(H, G, N, max_rows, min_steps=2):
  """Largest column-group tile TG (divisor of G) with TG*H <= max_rows.

  Second-to-last block dim must be a multiple of 8 or the full extent; prefers
  >= min_steps total grid steps; never silently returns a whole-image tile as
  a fallback (picks the smallest legal tile instead).
  """
  cands = [tg for tg in range(1, G + 1)
           if G % tg == 0 and ((tg * H) % 8 == 0 or tg == G)]
  fit = [tg for tg in cands if tg * H <= max_rows and N * (G // tg) >= min_steps]
  if fit:
    return max(fit)
  fit = [tg for tg in cands if tg * H <= max_rows]
  if fit:
    return max(fit)
  return min(cands)


# -------------------------- params / layout packing -------------------------


def prepare_packed_params(params, pack, *, eps=0.001, matmul_dtype=jnp.bfloat16):
  """Precompute (once, outside the hot path) the packed kernel weights."""
  P = pack
  f32 = jnp.float32

  def lanes(v):                          # (C,) -> (1, P*C), channel = lane % C
    return jnp.tile(v.astype(f32)[None, :], (1, P))

  def dw(w):                             # (C, 3) -> (3, P*C)
    return jnp.tile(w.astype(f32).T, (1, P))

  def pw(w):                             # (C,C) -> block-diagonal (P*C, P*C)
    wt = w.astype(f32).T                 # y @ W.T
    return jnp.kron(jnp.eye(P, dtype=f32), wt).astype(matmul_dtype)

  s1 = params["bn1_gamma"] / jnp.sqrt(params["bn1_var"] + eps)
  t1 = (params["pw1_b"] - params["bn1_mean"]) * s1 + params["bn1_beta"]
  s2 = params["bn2_gamma"] / jnp.sqrt(params["bn2_var"] + eps)
  t2 = (params["pw2_b"] - params["bn2_mean"]) * s2 + params["bn2_beta"]

  return (
      dw(params["dw1_w"]), lanes(params["dw1_b"]),
      pw(params["pw1_w"]), lanes(s1), lanes(t1),
      dw(params["dw2_w"]), lanes(params["dw2_b"]),
      pw(params["pw2_w"]), lanes(s2), lanes(t2),
  )


def pack_nchw(x_nchw, pack, io_dtype):
  """(N,C,H,W) -> (N, (W/P)*H, P*C); (n, g*H+h, p*C+c) = x[n, c, h, g*P+p]."""
  N, C, H, W = x_nchw.shape
  G = W // pack
  xg = x_nchw.reshape(N, C, H, G, pack)
  return jnp.transpose(xg, (0, 3, 2, 4, 1)).reshape(N, G * H, pack * C).astype(io_dtype)


def unpack_to_nchw(xp, N, C, H, W, pack, dtype=jnp.float32):
  G = W // pack
  x5 = xp.reshape(N, G, H, pack, C).astype(dtype)
  return jnp.transpose(x5, (0, 4, 2, 1, 3)).reshape(N, C, H, W)


# ------------------------------ hot-path call -------------------------------


def non_bottleneck_1d_packed(xp, packed_params, H, dilated, *,
                             max_tile_rows=None, vmem_limit_bytes=None):
  """Packed-layout forward: xp is (N, G*H, L) (L = P*C), returned in-place-shaped."""
  N, GH, L = xp.shape
  G = GH // H
  io_dtype = xp.dtype
  d_rows, d_vmem = _default_config()
  max_tile_rows = d_rows if max_tile_rows is None else max_tile_rows
  vmem_limit_bytes = d_vmem if vmem_limit_bytes is None else vmem_limit_bytes

  # Size the tile from the VMEM budget: 2x double-buffered in + out blocks plus
  # ~6 live (rows, L) f32 temporaries inside the kernel; keep 2x headroom.
  io_bytes = jnp.dtype(io_dtype).itemsize
  bytes_per_row = L * (4 * io_bytes + 24) + 64
  rows_cap = max(H, (vmem_limit_bytes // 2) // bytes_per_row)
  tg = _choose_tile_g(H, G, N, min(max_tile_rows, rows_cap))
  tile_rows = tg * H
  num_tiles = G // tg

  # Precomputed f32 validity masks (row index within its column): up/down taps
  # for d=1 and d=dilated.  Multiplies replace int-compare + select in-kernel.
  h = jnp.arange(tile_rows, dtype=jnp.int32) % H
  d = dilated
  masks = jnp.stack([h >= 1, h < H - 1, h >= d, h < H - d],
                    axis=1).astype(jnp.float32)          # (tile_rows, 4)

  def rep(a):                               # replicated (constant index map)
    nd = a.ndim
    return pl.BlockSpec(a.shape, lambda n, t, _nd=nd: (0,) * _nd)

  kernel = functools.partial(_nb1d_kernel, dilated=dilated)

  return pl.pallas_call(
      kernel,
      out_shape=jax.ShapeDtypeStruct((N, GH, L), io_dtype),
      grid=(N, num_tiles),
      in_specs=[pl.BlockSpec((1, tile_rows, L), lambda n, t: (n, t, 0)),
                rep(masks)] + [rep(a) for a in packed_params],
      out_specs=pl.BlockSpec((1, tile_rows, L), lambda n, t: (n, t, 0)),
      input_output_aliases={0: 0},          # output reuses the input HBM buffer
      compiler_params=pltpu.CompilerParams(
          dimension_semantics=("parallel", "parallel"),
          vmem_limit_bytes=vmem_limit_bytes),
  )(xp, masks, *packed_params)


# --------------------------- NCHW convenience wrapper ------------------------


def non_bottleneck_1d_pallas(x_nchw, params, dilated, *,
                             io_dtype=jnp.bfloat16, matmul_dtype=jnp.bfloat16,
                             max_pack=None, max_tile_rows=None,
                             vmem_limit_bytes=None):
  """Matches the PyTorch module on NCHW f32 input.

  The pack/unpack layout conversion here exists only to present the NCHW
  interface for testing; in an ERFNet pipeline the activations stay in the
  packed (N, G*H, P*C) layout across layers and only the pallas_call runs.
  """
  N, C, H, W = x_nchw.shape
  P = _choose_pack(C, W, N, max_pack)
  packed_params = prepare_packed_params(params, P, matmul_dtype=matmul_dtype)
  xp = pack_nchw(x_nchw, P, io_dtype)
  out_p = non_bottleneck_1d_packed(xp, packed_params, H, dilated,
                                   max_tile_rows=max_tile_rows,
                                   vmem_limit_bytes=vmem_limit_bytes)
  return unpack_to_nchw(out_p, N, C, H, W, P, jnp.float32)


# -------------------------- pure-JAX reference ------------------------------


def non_bottleneck_1d_ref(x, params, dilated):
  N, C, H, W = x.shape
  eps = 0.001
  prec = jax.lax.Precision.HIGHEST

  def dw_conv(a, w, b, d):
    w4 = w.reshape(C, 1, 3, 1)                       # OIHW, groups=C
    out = jax.lax.conv_general_dilated(
        a, w4, window_strides=(1, 1), padding=((d, d), (0, 0)),
        rhs_dilation=(d, 1), dimension_numbers=("NCHW", "OIHW", "NCHW"),
        feature_group_count=C, precision=prec)
    return out + b.reshape(1, C, 1, 1)

  def pw_conv(a, w, b):
    w4 = w.reshape(C, C, 1, 1)
    out = jax.lax.conv_general_dilated(
        a, w4, window_strides=(1, 1), padding="VALID",
        dimension_numbers=("NCHW", "OIHW", "NCHW"), precision=prec)
    return out + b.reshape(1, C, 1, 1)

  def bn(a, g, bta, m, v):
    return ((a - m.reshape(1, C, 1, 1)) / jnp.sqrt(v.reshape(1, C, 1, 1) + eps)
            ) * g.reshape(1, C, 1, 1) + bta.reshape(1, C, 1, 1)

  y = dw_conv(x, params["dw1_w"], params["dw1_b"], 1)
  y = jax.nn.relu(y)
  y = pw_conv(y, params["pw1_w"], params["pw1_b"])
  y = bn(y, params["bn1_gamma"], params["bn1_beta"],
         params["bn1_mean"], params["bn1_var"])
  y = jax.nn.relu(y)
  y = dw_conv(y, params["dw2_w"], params["dw2_b"], dilated)
  y = jax.nn.relu(y)
  y = pw_conv(y, params["pw2_w"], params["pw2_b"])
  y = bn(y, params["bn2_gamma"], params["bn2_beta"],
         params["bn2_mean"], params["bn2_var"])
  return jax.nn.relu(y + x)


# --------------------------------- main --------------------------------------


if __name__ == "__main__":
  N, C, H, W = 2, 4, 16, 64
  dilated = 2
  # dropprob = 0.0 -> the PyTorch forward skips dropout.

  ks = jax.random.split(jax.random.PRNGKey(0), 17)
  params = {
      # conv3x1_1: torch weight (C,1,3,1) -> stored (C,3); bias (C,)
      "dw1_w": 0.3 * jax.random.normal(ks[0], (C, 3), jnp.float32),
      "dw1_b": 0.1 * jax.random.normal(ks[1], (C,), jnp.float32),
      # conv1x1_1: torch weight (C,C,1,1) -> stored (C_out,C_in); bias (C,)
      "pw1_w": 0.3 * jax.random.normal(ks[2], (C, C), jnp.float32),
      "pw1_b": 0.1 * jax.random.normal(ks[3], (C,), jnp.float32),
      "bn1_gamma": 1.0 + 0.1 * jax.random.normal(ks[4], (C,), jnp.float32),
      "bn1_beta": 0.1 * jax.random.normal(ks[5], (C,), jnp.float32),
      "bn1_mean": 0.1 * jax.random.normal(ks[6], (C,), jnp.float32),
      "bn1_var": jax.random.uniform(ks[7], (C,), jnp.float32, 0.5, 1.5),
      "dw2_w": 0.3 * jax.random.normal(ks[8], (C, 3), jnp.float32),
      "dw2_b": 0.1 * jax.random.normal(ks[9], (C,), jnp.float32),
      "pw2_w": 0.3 * jax.random.normal(ks[10], (C, C), jnp.float32),
      "pw2_b": 0.1 * jax.random.normal(ks[11], (C,), jnp.float32),
      "bn2_gamma": 1.0 + 0.1 * jax.random.normal(ks[12], (C,), jnp.float32),
      "bn2_beta": 0.1 * jax.random.normal(ks[13], (C,), jnp.float32),
      "bn2_mean": 0.1 * jax.random.normal(ks[14], (C,), jnp.float32),
      "bn2_var": jax.random.uniform(ks[15], (C,), jnp.float32, 0.5, 1.5),
  }
  x = jax.random.normal(ks[16], (N, C, H, W), jnp.float32)

  ref = jax.block_until_ready(non_bottleneck_1d_ref(x, params, dilated))

  # 1) f32 I/O + f32 matmul, reduced packing (P=16 -> 64 lanes) and a forced
  #    small tile so the multi-tile grid path is exercised: tight check.
  out_f32 = jax.block_until_ready(
      non_bottleneck_1d_pallas(x, params, dilated,
                               io_dtype=jnp.float32, matmul_dtype=jnp.float32,
                               max_pack=16, max_tile_rows=16))
  assert out_f32.shape == (N, C, H, W)
  err_f32 = float(jnp.max(jnp.abs(out_f32 - ref)))
  assert err_f32 < 1e-3, f"f32 path max abs error too large: {err_f32}"

  # 2) default config: bf16 activations in HBM, bf16 matmul operands, full
  #    lane packing (P=32 -> 128 lanes), auto tile size: looser check.
  out_bf16 = jax.block_until_ready(non_bottleneck_1d_pallas(x, params, dilated))
  assert out_bf16.shape == (N, C, H, W)
  err_bf16 = float(jnp.max(jnp.abs(out_bf16 - ref)))
  assert err_bf16 < 1e-1, f"bf16 path max abs error too large: {err_bf16}"

  print("KERNEL_OK")
</pallas_src>

<mosaic_0001>
module attributes {stable_mosaic.version = 11 : i64} {
  func.func @_nb1d_kernel(%arg0: i32, %arg1: i32, %arg2: memref<1x16x64xf32, #tpu.memory_space<vmem>>, %arg3: memref<16x4xf32, #tpu.memory_space<vmem>>, %arg4: memref<3x64xf32, #tpu.memory_space<vmem>>, %arg5: memref<1x64xf32, #tpu.memory_space<vmem>>, %arg6: memref<64x64xf32, #tpu.memory_space<vmem>>, %arg7: memref<1x64xf32, #tpu.memory_space<vmem>>, %arg8: memref<1x64xf32, #tpu.memory_space<vmem>>, %arg9: memref<3x64xf32, #tpu.memory_space<vmem>>, %arg10: memref<1x64xf32, #tpu.memory_space<vmem>>, %arg11: memref<64x64xf32, #tpu.memory_space<vmem>>, %arg12: memref<1x64xf32, #tpu.memory_space<vmem>>, %arg13: memref<1x64xf32, #tpu.memory_space<vmem>>, %arg14: memref<1x16x64xf32, #tpu.memory_space<vmem>>) attributes {dimension_semantics = [#tpu.dimension_semantics<parallel>, #tpu.dimension_semantics<parallel>], iteration_bounds = array<i64: 2, 4>, scalar_prefetch = 0 : i64, scratch_operands = 0 : i64, tpu.core_type = #tpu.core_type<tc>, window_params = [{transform_indices = @transform_0, window_bounds = array<i64: 1, 16, 64>}, {pipeline_mode = #tpu.pipeline_mode<synchronous>, transform_indices = @transform_1, window_bounds = array<i64: 16, 4>}, {pipeline_mode = #tpu.pipeline_mode<synchronous>, transform_indices = @transform_2, window_bounds = array<i64: 3, 64>}, {pipeline_mode = #tpu.pipeline_mode<synchronous>, transform_indices = @transform_3, window_bounds = array<i64: 1, 64>}, {pipeline_mode = #tpu.pipeline_mode<synchronous>, transform_indices = @transform_4, window_bounds = array<i64: 64, 64>}, {pipeline_mode = #tpu.pipeline_mode<synchronous>, transform_indices = @transform_5, window_bounds = array<i64: 1, 64>}, {pipeline_mode = #tpu.pipeline_mode<synchronous>, transform_indices = @transform_6, window_bounds = array<i64: 1, 64>}, {pipeline_mode = #tpu.pipeline_mode<synchronous>, transform_indices = @transform_7, window_bounds = array<i64: 3, 64>}, {pipeline_mode = #tpu.pipeline_mode<synchronous>, transform_indices = @transform_8, window_bounds = array<i64: 1, 64>}, {pipeline_mode = #tpu.pipeline_mode<synchronous>, transform_indices = @transform_9, window_bounds = array<i64: 64, 64>}, {pipeline_mode = #tpu.pipeline_mode<synchronous>, transform_indices = @transform_10, window_bounds = array<i64: 1, 64>}, {pipeline_mode = #tpu.pipeline_mode<synchronous>, transform_indices = @transform_11, window_bounds = array<i64: 1, 64>}, {transform_indices = @transform_12, window_bounds = array<i64: 1, 16, 64>}]} {
    %c0 = arith.constant 0 : index
    %c0_0 = arith.constant 0 : index
    %c0_1 = arith.constant 0 : index
    %0 = vector.load %arg2[%c0, %c0_0, %c0_1] : memref<1x16x64xf32, #tpu.memory_space<vmem>>, vector<1x16x64xf32>
    %1 = vector.shape_cast %0 : vector<1x16x64xf32> to vector<16x64xf32>
    %c0_2 = arith.constant 0 : index
    %c0_3 = arith.constant 0 : index
    %2 = vector.load %arg3[%c0_2, %c0_3] : memref<16x4xf32, #tpu.memory_space<vmem>>, vector<16x4xf32>
    %3 = vector.extract_strided_slice %2 {offsets = [0, 0], sizes = [16, 1], strides = [1, 1]} : vector<16x4xf32> to vector<16x1xf32>
    %4 = vector.extract_strided_slice %2 {offsets = [0, 1], sizes = [16, 1], strides = [1, 1]} : vector<16x4xf32> to vector<16x1xf32>
    %5 = vector.extract_strided_slice %2 {offsets = [0, 2], sizes = [16, 1], strides = [1, 1]} : vector<16x4xf32> to vector<16x1xf32>
    %6 = vector.extract_strided_slice %2 {offsets = [0, 3], sizes = [16, 1], strides = [1, 1]} : vector<16x4xf32> to vector<16x1xf32>
    %c0_4 = arith.constant 0 : index
    %c0_5 = arith.constant 0 : index
    %7 = vector.load %arg4[%c0_4, %c0_5] : memref<3x64xf32, #tpu.memory_space<vmem>>, vector<3x64xf32>
    %c0_6 = arith.constant 0 : index
    %c0_7 = arith.constant 0 : index
    %8 = vector.load %arg5[%c0_6, %c0_7] : memref<1x64xf32, #tpu.memory_space<vmem>>, vector<1x64xf32>
    %c1_i32 = arith.constant 1 : i32
    %9 = tpu.dynamic_rotate %1 by %c1_i32 dim 0 : vector<16x64xf32>, i32 -> vector<16x64xf32>
    %10 = vector.broadcast %3 : vector<16x1xf32> to vector<16x64xf32>
    %11 = arith.mulf %9, %10 : vector<16x64xf32>
    %c15_i32 = arith.constant 15 : i32
    %12 = tpu.dynamic_rotate %1 by %c15_i32 dim 0 : vector<16x64xf32>, i32 -> vector<16x64xf32>
    %13 = vector.broadcast %4 : vector<16x1xf32> to vector<16x64xf32>
    %14 = arith.mulf %12, %13 : vector<16x64xf32>
    %15 = vector.extract_strided_slice %7 {offsets = [0, 0], sizes = [1, 64], strides = [1, 1]} : vector<3x64xf32> to vector<1x64xf32>
    %16 = vector.broadcast %15 : vector<1x64xf32> to vector<16x64xf32>
    %17 = arith.mulf %16, %11 : vector<16x64xf32>
    %18 = vector.extract_strided_slice %7 {offsets = [1, 0], sizes = [1, 64], strides = [1, 1]} : vector<3x64xf32> to vector<1x64xf32>
    %19 = vector.broadcast %18 : vector<1x64xf32> to vector<16x64xf32>
    %20 = arith.mulf %19, %1 : vector<16x64xf32>
    %21 = arith.addf %17, %20 : vector<16x64xf32>
    %22 = vector.extract_strided_slice %7 {offsets = [2, 0], sizes = [1, 64], strides = [1, 1]} : vector<3x64xf32> to vector<1x64xf32>
    %23 = vector.broadcast %22 : vector<1x64xf32> to vector<16x64xf32>
    %24 = arith.mulf %23, %14 : vector<16x64xf32>
    %25 = arith.addf %21, %24 : vector<16x64xf32>
    %26 = vector.broadcast %8 : vector<1x64xf32> to vector<16x64xf32>
    %27 = arith.addf %25, %26 : vector<16x64xf32>
    %cst = arith.constant 0.000000e+00 : f32
    %28 = vector.broadcast %cst : f32 to vector<16x64xf32>
    %29 = arith.maximumf %27, %28 : vector<16x64xf32>
    %c0_8 = arith.constant 0 : index
    %c0_9 = arith.constant 0 : index
    %30 = vector.load %arg7[%c0_8, %c0_9] : memref<1x64xf32, #tpu.memory_space<vmem>>, vector<1x64xf32>
    %c0_10 = arith.constant 0 : index
    %c0_11 = arith.constant 0 : index
    %31 = vector.load %arg8[%c0_10, %c0_11] : memref<1x64xf32, #tpu.memory_space<vmem>>, vector<1x64xf32>
    %c0_12 = arith.constant 0 : index
    %c0_13 = arith.constant 0 : index
    %32 = vector.load %arg6[%c0_12, %c0_13] : memref<64x64xf32, #tpu.memory_space<vmem>>, vector<64x64xf32>
    %cst_14 = arith.constant dense<0.000000e+00> : vector<16x64xf32>
    %33 = tpu.matmul %29, %32, %cst_14 {dimension_numbers = #tpu.dot_dimension_numbers<[1], [0], [0], [1], [0, 0, 1, 1], [], []>} : vector<16x64xf32>, vector<64x64xf32>, vector<16x64xf32> -> vector<16x64xf32>
    %34 = vector.broadcast %30 : vector<1x64xf32> to vector<16x64xf32>
    %35 = arith.mulf %33, %34 : vector<16x64xf32>
    %36 = vector.broadcast %31 : vector<1x64xf32> to vector<16x64xf32>
    %37 = arith.addf %35, %36 : vector<16x64xf32>
    %cst_15 = arith.constant 0.000000e+00 : f32
    %38 = vector.broadcast %cst_15 : f32 to vector<16x64xf32>
    %39 = arith.maximumf %37, %38 : vector<16x64xf32>
    %c0_16 = arith.constant 0 : index
    %c0_17 = arith.constant 0 : index
    %40 = vector.load %arg9[%c0_16, %c0_17] : memref<3x64xf32, #tpu.memory_space<vmem>>, vector<3x64xf32>
    %c0_18 = arith.constant 0 : index
    %c0_19 = arith.constant 0 : index
    %41 = vector.load %arg10[%c0_18, %c0_19] : memref<1x64xf32, #tpu.memory_space<vmem>>, vector<1x64xf32>
    %c2_i32 = arith.constant 2 : i32
    %42 = tpu.dynamic_rotate %39 by %c2_i32 dim 0 : vector<16x64xf32>, i32 -> vector<16x64xf32>
    %43 = vector.broadcast %5 : vector<16x1xf32> to vector<16x64xf32>
    %44 = arith.mulf %42, %43 : vector<16x64xf32>
    %c14_i32 = arith.constant 14 : i32
    %45 = tpu.dynamic_rotate %39 by %c14_i32 dim 0 : vector<16x64xf32>, i32 -> vector<16x64xf32>
    %46 = vector.broadcast %6 : vector<16x1xf32> to vector<16x64xf32>
    %47 = arith.mulf %45, %46 : vector<16x64xf32>
    %48 = vector.extract_strided_slice %40 {offsets = [0, 0], sizes = [1, 64], strides = [1, 1]} : vector<3x64xf32> to vector<1x64xf32>
    %49 = vector.broadcast %48 : vector<1x64xf32> to vector<16x64xf32>
    %50 = arith.mulf %49, %44 : vector<16x64xf32>
    %51 = vector.extract_strided_slice %40 {offsets = [1, 0], sizes = [1, 64], strides = [1, 1]} : vector<3x64xf32> to vector<1x64xf32>
    %52 = vector.broadcast %51 : vector<1x64xf32> to vector<16x64xf32>
    %53 = arith.mulf %52, %39 : vector<16x64xf32>
    %54 = arith.addf %50, %53 : vector<16x64xf32>
    %55 = vector.extract_strided_slice %40 {offsets = [2, 0], sizes = [1, 64], strides = [1, 1]} : vector<3x64xf32> to vector<1x64xf32>
    %56 = vector.broadcast %55 : vector<1x64xf32> to vector<16x64xf32>
    %57 = arith.mulf %56, %47 : vector<16x64xf32>
    %58 = arith.addf %54, %57 : vector<16x64xf32>
    %59 = vector.broadcast %41 : vector<1x64xf32> to vector<16x64xf32>
    %60 = arith.addf %58, %59 : vector<16x64xf32>
    %cst_20 = arith.constant 0.000000e+00 : f32
    %61 = vector.broadcast %cst_20 : f32 to vector<16x64xf32>
    %62 = arith.maximumf %60, %61 : vector<16x64xf32>
    %c0_21 = arith.constant 0 : index
    %c0_22 = arith.constant 0 : index
    %63 = vector.load %arg12[%c0_21, %c0_22] : memref<1x64xf32, #tpu.memory_space<vmem>>, vector<1x64xf32>
    %c0_23 = arith.constant 0 : index
    %c0_24 = arith.constant 0 : index
    %64 = vector.load %arg13[%c0_23, %c0_24] : memref<1x64xf32, #tpu.memory_space<vmem>>, vector<1x64xf32>
    %c0_25 = arith.constant 0 : index
    %c0_26 = arith.constant 0 : index
    %65 = vector.load %arg11[%c0_25, %c0_26] : memref<64x64xf32, #tpu.memory_space<vmem>>, vector<64x64xf32>
    %cst_27 = arith.constant dense<0.000000e+00> : vector<16x64xf32>
    %66 = tpu.matmul %62, %65, %cst_27 {dimension_numbers = #tpu.dot_dimension_numbers<[1], [0], [0], [1], [0, 0, 1, 1], [], []>} : vector<16x64xf32>, vector<64x64xf32>, vector<16x64xf32> -> vector<16x64xf32>
    %67 = vector.broadcast %63 : vector<1x64xf32> to vector<16x64xf32>
    %68 = arith.mulf %66, %67 : vector<16x64xf32>
    %69 = vector.broadcast %64 : vector<1x64xf32> to vector<16x64xf32>
    %70 = arith.addf %68, %69 : vector<16x64xf32>
    %71 = arith.addf %70, %1 : vector<16x64xf32>
    %cst_28 = arith.constant 0.000000e+00 : f32
    %72 = vector.broadcast %cst_28 : f32 to vector<16x64xf32>
    %73 = arith.maximumf %71, %72 : vector<16x64xf32>
    %c0_29 = arith.constant 0 : index
    %c0_30 = arith.constant 0 : index
    %c0_31 = arith.constant 0 : index
    %74 = vector.load %arg14[%c0_29, %c0_30, %c0_31] : memref<1x16x64xf32, #tpu.memory_space<vmem>>, vector<1x16x64xf32>
    %75 = vector.shape_cast %74 : vector<1x16x64xf32> to vector<16x64xf32>
    %76 = vector.shape_cast %73 : vector<16x64xf32> to vector<1x16x64xf32>
    tpu.vector_store %arg14[%c0_29, %c0_30, %c0_31], %76 {strides = array<i32>} : memref<1x16x64xf32, #tpu.memory_space<vmem>>, vector<1x16x64xf32>,
    return
  }
  func.func @transform_0(%arg0: i32, %arg1: i32) -> (i32, i32, i32) {
    %c0_i32 = arith.constant 0 : i32
    %c0_i32_0 = arith.constant 0 : i32
    return %arg0, %arg1, %c0_i32 : i32, i32, i32
  }
  func.func @transform_1(%arg0: i32, %arg1: i32) -> (i32, i32) {
    %c0_i32 = arith.constant 0 : i32
    %c0_i32_0 = arith.constant 0 : i32
    %c0_i32_1 = arith.constant 0 : i32
    return %c0_i32, %c0_i32_0 : i32, i32
  }
  func.func @transform_2(%arg0: i32, %arg1: i32) -> (i32, i32) {
    %c0_i32 = arith.constant 0 : i32
    %c0_i32_0 = arith.constant 0 : i32
    %c0_i32_1 = arith.constant 0 : i32
    return %c0_i32, %c0_i32_0 : i32, i32
  }
  func.func @transform_3(%arg0: i32, %arg1: i32) -> (i32, i32) {
    %c0_i32 = arith.constant 0 : i32
    %c0_i32_0 = arith.constant 0 : i32
    %c0_i32_1 = arith.constant 0 : i32
    return %c0_i32, %c0_i32_0 : i32, i32
  }
  func.func @transform_4(%arg0: i32, %arg1: i32) -> (i32, i32) {
    %c0_i32 = arith.constant 0 : i32
    %c0_i32_0 = arith.constant 0 : i32
    %c0_i32_1 = arith.constant 0 : i32
    return %c0_i32, %c0_i32_0 : i32, i32
  }
  func.func @transform_5(%arg0: i32, %arg1: i32) -> (i32, i32) {
    %c0_i32 = arith.constant 0 : i32
    %c0_i32_0 = arith.constant 0 : i32
    %c0_i32_1 = arith.constant 0 : i32
    return %c0_i32, %c0_i32_0 : i32, i32
  }
  func.func @transform_6(%arg0: i32, %arg1: i32) -> (i32, i32) {
    %c0_i32 = arith.constant 0 : i32
    %c0_i32_0 = arith.constant 0 : i32
    %c0_i32_1 = arith.constant 0 : i32
    return %c0_i32, %c0_i32_0 : i32, i32
  }
  func.func @transform_7(%arg0: i32, %arg1: i32) -> (i32, i32) {
    %c0_i32 = arith.constant 0 : i32
    %c0_i32_0 = arith.constant 0 : i32
    %c0_i32_1 = arith.constant 0 : i32
    return %c0_i32, %c0_i32_0 : i32, i32
  }
  func.func @transform_8(%arg0: i32, %arg1: i32) -> (i32, i32) {
    %c0_i32 = arith.constant 0 : i32
    %c0_i32_0 = arith.constant 0 : i32
    %c0_i32_1 = arith.constant 0 : i32
    return %c0_i32, %c0_i32_0 : i32, i32
  }
  func.func @transform_9(%arg0: i32, %arg1: i32) -> (i32, i32) {
    %c0_i32 = arith.constant 0 : i32
    %c0_i32_0 = arith.constant 0 : i32
    %c0_i32_1 = arith.constant 0 : i32
    return %c0_i32, %c0_i32_0 : i32, i32
  }
  func.func @transform_10(%arg0: i32, %arg1: i32) -> (i32, i32) {
    %c0_i32 = arith.constant 0 : i32
    %c0_i32_0 = arith.constant 0 : i32
    %c0_i32_1 = arith.constant 0 : i32
    return %c0_i32, %c0_i32_0 : i32, i32
  }
  func.func @transform_11(%arg0: i32, %arg1: i32) -> (i32, i32) {
    %c0_i32 = arith.constant 0 : i32
    %c0_i32_0 = arith.constant 0 : i32
    %c0_i32_1 = arith.constant 0 : i32
    return %c0_i32, %c0_i32_0 : i32, i32
  }
  func.func @transform_12(%arg0: i32, %arg1: i32) -> (i32, i32, i32) {
    %c0_i32 = arith.constant 0 : i32
    %c0_i32_0 = arith.constant 0 : i32
    return %arg0, %arg1, %c0_i32 : i32, i32, i32
  }
}

</mosaic_0001>

<llo_original>
// kernel: tpu_custom_call.1
$region0: #{tpu_custom_call.1}
  #allocation0 [shape = 'u32[]', space=smem, size = 0x4, offset = 0x4, fixed_abs, tag = 'smem constant byte address 0x4 - core index']
  #allocation1 [shape = 'u32[144,128]{1,0:T(1,128)}', space=vmem, size = 0x12000, scoped, tag = 'internal scratch']
  %s0 = inlined_call_operand.hbm [shape: f32[2,64,64], index: 0, kind: input, shape index: {}, may-alias: {0,12}]
  %s1 = inlined_call_operand.vmem [shape: f32[16,4], index: 1, kind: input, shape index: {}]
  %s2 = inlined_call_operand.vmem [shape: f32[3,64], index: 2, kind: input, shape index: {}]
  %s3 = inlined_call_operand.vmem [shape: f32[1,64], index: 3, kind: input, shape index: {}]
  %s4 = inlined_call_operand.vmem [shape: f32[64,64], index: 4, kind: input, shape index: {}]
  %s5 = inlined_call_operand.vmem [shape: f32[1,64], index: 5, kind: input, shape index: {}]
  %s6 = inlined_call_operand.vmem [shape: f32[1,64], index: 6, kind: input, shape index: {}]
  %s7 = inlined_call_operand.vmem [shape: f32[3,64], index: 7, kind: input, shape index: {}]
  %s8 = inlined_call_operand.vmem [shape: f32[1,64], index: 8, kind: input, shape index: {}]
  %s9 = inlined_call_operand.vmem [shape: f32[64,64], index: 9, kind: input, shape index: {}]
  %s10 = inlined_call_operand.vmem [shape: f32[1,64], index: 10, kind: input, shape index: {}]
  %s11 = inlined_call_operand.vmem [shape: f32[1,64], index: 11, kind: input, shape index: {}]
  %s12 = inlined_call_operand.hbm [shape: f32[2,64,64], index: 12, kind: output, shape index: {}, may-alias: {0,12}]
  %s13 = sld [smem:[#allocation0]]
  $region85: #{tpu_custom_call.1} parent=0
    _
  %s15 = ssub.s32 1, %s13
  %s16 = scalar_select 0, %s15, %s13
  $region1: #{tpu_custom_call.1} parent=0
    #allocation2 [shape = 'u8[16384]{0}', space=vmem, size = 0x4000, scoped, tag = 'input window, operand 0']
    #allocation3 [shape = 's32[2]{0}', space=sflag, size = 0x8, scoped, tag = 'scoped memory for tpu_custom_call.1']
    #allocation4 [shape = 's32[2]{0}', space=sflag, size = 0x8, scoped, tag = 'scoped memory for tpu_custom_call.1']
    #allocation5 [shape = 'u8[16384]{0}', space=vmem, size = 0x4000, scoped, tag = 'output window, operand 0']
    %17 = vsyncpa [#allocation3], 0
    %s18 = scalar_lea.sflag [#allocation3], 1
    %19 = vsyncpa %s18, 0
    %20 = vsyncpa [#allocation4], 0
    %s21 = scalar_lea.sflag [#allocation4], 1
    %22 = vsyncpa %s21, 0
    loop: start=0, step=1, limit=10
    $region2: #{tpu_custom_call.1} parent=1 // loop_pre_header
      _
    $region3: #{tpu_custom_call.1} parent=1 // loop_header
      %s24 = sphi 0, %s28
      %p25 = scmp.ge.s32.totalorder %s24, 10
      %s31 = sphi 0, %s43
      %s32 = sphi 0, %s39
      %s33 = sphi 0, %s31
      %s34 = sphi 0, %s32
      %s35 = sphi 0, %s33
      %s36 = sphi 0, %s34
      %s48 = sphi 0, %s50
      %s51 = sphi 0, %s48
      %s52 = sphi 0, %s51
      %s68 = sphi 0, %s52
      %s72 = sphi 0, %s72
      %s74 = sphi 0, %s72
      %s75 = sphi 0, %s74
      %s89 = sphi 0, %s75
      %s93 = sphi 0, %s93
      %s95 = sphi 0, %s93
      %s96 = sphi 0, %s95
      %s110 = sphi 0, %s96
      %s114 = sphi 0, %s114
      %s116 = sphi 0, %s114
      %s117 = sphi 0, %s116
      %s131 = sphi 0, %s117
      %s135 = sphi 0, %s135
      %s137 = sphi 0, %s135
      %s138 = sphi 0, %s137
      %s152 = sphi 0, %s138
      %s156 = sphi 0, %s156
      %s158 = sphi 0, %s156
      %s159 = sphi 0, %s158
      %s173 = sphi 0, %s159
      %s177 = sphi 0, %s177
      %s179 = sphi 0, %s177
      %s180 = sphi 0, %s179
      %s194 = sphi 0, %s180
      %s198 = sphi 0, %s198
      %s200 = sphi 0, %s198
      %s201 = sphi 0, %s200
      %s215 = sphi 0, %s201
      %s219 = sphi 0, %s219
      %s221 = sphi 0, %s219
      %s222 = sphi 0, %s221
      %s236 = sphi 0, %s222
      %s240 = sphi 0, %s240
      %s242 = sphi 0, %s240
      %s243 = sphi 0, %s242
      %s257 = sphi 0, %s243
      %s261 = sphi 0, %s261
      %s263 = sphi 0, %s261
      %s264 = sphi 0, %s263
      %s278 = sphi 0, %s264
      %s282 = sphi 0, %s282
      %s284 = sphi 0, %s282
      %s285 = sphi 0, %s284
      %s299 = sphi 0, %s285
      %s307 = sphi 0, %s309
      %s310 = sphi 0, %s307
      %s311 = sphi 0, %s310
      %s327 = sphi 0, %s311
    $region4: #{tpu_custom_call.1} parent=1 // loop_header_branch
      %27 = sbr.rel (%p25) target = $region8
    $region5: #{tpu_custom_call.1} parent=1 // loop_body
      %s29 = ssub.s32 %s24, 1
      %s30 = ssub.s32 %s24, 2
      %s37 = sadd.s32 1, %s32
      %p38 = scmp.ge.s32.totalorder %s37, 4
      %s39 = scalar_select %p38, 0, %s37
      %s40 = sadd.s32 1, %s31
      %s41 = scalar_select %p38, %s40, %s31
      %p42 = scmp.ge.s32.totalorder %s41, 2
      %s43 = scalar_select %p42, 0, %s41
      %s44 = ssub.s32 %s31, %s43
      %s45 = ssub.s32 %s32, %s39
      %s46 = sor.u32 %s44, %s45
      %p47 = scmp.eq.s32.totalorder %s46, 0
      %s49 = sadd.s32 %s48, 1
      %s50 = scalar_select %p47, %s48, %s49
      %p53 = pneg %p47
      %p54 = scmp.eq.s32.totalorder %s24, 7
      %p55 = por %p53, %p54
      %p56 = scmp.ne.s32.totalorder %s48, %s51
      %p57 = scmp.eq.s32.totalorder %s24, 0
      %p58 = por %p56, %p57
      %p59 = scmp.ne.s32.totalorder %s48, %s51
      %p60 = scmp.eq.s32.totalorder %s29, 7
      %p61 = por %p59, %p60
      %p62 = scmp.ne.s32.totalorder %s51, %s52
      %p63 = scmp.eq.s32.totalorder %s29, 0
      %p64 = por %p62, %p63
      %p65 = scmp.ne.s32.totalorder %s51, %s52
      %p66 = scmp.eq.s32.totalorder %s30, 7
      %p67 = por %p65, %p66
      %p69 = scmp.ne.s32.totalorder %s52, %s68
      %p70 = scmp.eq.s32.totalorder %s30, 0
      %p71 = por %p69, %p70
      %s73 = sadd.s32 %s72, 1
      %p76 = scmp.eq.s32.totalorder %s24, 7
      %p77 = scmp.ne.s32.totalorder %s72, %s74
      %p78 = scmp.eq.s32.totalorder %s24, 0
      %p79 = por %p77, %p78
      %p80 = scmp.ne.s32.totalorder %s72, %s74
      %p81 = scmp.eq.s32.totalorder %s29, 7
      %p82 = por %p80, %p81
      %p83 = scmp.ne.s32.totalorder %s74, %s75
      %p84 = scmp.eq.s32.totalorder %s29, 0
      %p85 = por %p83, %p84
      %p86 = scmp.ne.s32.totalorder %s74, %s75
      %p87 = scmp.eq.s32.totalorder %s30, 7
      %p88 = por %p86, %p87
      %p90 = scmp.ne.s32.totalorder %s75, %s89
      %p91 = scmp.eq.s32.totalorder %s30, 0
      %p92 = por %p90, %p91
      %s94 = sadd.s32 %s93, 1
      %p97 = scmp.eq.s32.totalorder %s24, 7
      %p98 = scmp.ne.s32.totalorder %s93, %s95
      %p99 = scmp.eq.s32.totalorder %s24, 0
      %p100 = por %p98, %p99
      %p101 = scmp.ne.s32.totalorder %s93, %s95
      %p102 = scmp.eq.s32.totalorder %s29, 7
      %p103 = por %p101, %p102
      %p104 = scmp.ne.s32.totalorder %s95, %s96
      %p105 = scmp.eq.s32.totalorder %s29, 0
      %p106 = por %p104, %p105
      %p107 = scmp.ne.s32.totalorder %s95, %s96
      %p108 = scmp.eq.s32.totalorder %s30, 7
      %p109 = por %p107, %p108
      %p111 = scmp.ne.s32.totalorder %s96, %s110
      %p112 = scmp.eq.s32.totalorder %s30, 0
      %p113 = por %p111, %p112
      %s115 = sadd.s32 %s114, 1
      %p118 = scmp.eq.s32.totalorder %s24, 7
      %p119 = scmp.ne.s32.totalorder %s114, %s116
      %p120 = scmp.eq.s32.totalorder %s24, 0
      %p121 = por %p119, %p120
      %p122 = scmp.ne.s32.totalorder %s114, %s116
      %p123 = scmp.eq.s32.totalorder %s29, 7
      %p124 = por %p122, %p123
      %p125 = scmp.ne.s32.totalorder %s116, %s117
      %p126 = scmp.eq.s32.totalorder %s29, 0
      %p127 = por %p125, %p126
      %p128 = scmp.ne.s32.totalorder %s116, %s117
      %p129 = scmp.eq.s32.totalorder %s30, 7
      %p130 = por %p128, %p129
      %p132 = scmp.ne.s32.totalorder %s117, %s131
      %p133 = scmp.eq.s32.totalorder %s30, 0
      %p134 = por %p132, %p133
      %s136 = sadd.s32 %s135, 1
      %p139 = scmp.eq.s32.totalorder %s24, 7
      %p140 = scmp.ne.s32.totalorder %s135, %s137
      %p141 = scmp.eq.s32.totalorder %s24, 0
      %p142 = por %p140, %p141
      %p143 = scmp.ne.s32.totalorder %s135, %s137
      %p144 = scmp.eq.s32.totalorder %s29, 7
      %p145 = por %p143, %p144
      %p146 = scmp.ne.s32.totalorder %s137, %s138
      %p147 = scmp.eq.s32.totalorder %s29, 0
      %p148 = por %p146, %p147
      %p149 = scmp.ne.s32.totalorder %s137, %s138
      %p150 = scmp.eq.s32.totalorder %s30, 7
      %p151 = por %p149, %p150
      %p153 = scmp.ne.s32.totalorder %s138, %s152
      %p154 = scmp.eq.s32.totalorder %s30, 0
      %p155 = por %p153, %p154
      %s157 = sadd.s32 %s156, 1
      %p160 = scmp.eq.s32.totalorder %s24, 7
      %p161 = scmp.ne.s32.totalorder %s156, %s158
      %p162 = scmp.eq.s32.totalorder %s24, 0
      %p163 = por %p161, %p162
      %p164 = scmp.ne.s32.totalorder %s156, %s158
      %p165 = scmp.eq.s32.totalorder %s29, 7
      %p166 = por %p164, %p165
      %p167 = scmp.ne.s32.totalorder %s158, %s159
      %p168 = scmp.eq.s32.totalorder %s29, 0
      %p169 = por %p167, %p168
      %p170 = scmp.ne.s32.totalorder %s158, %s159
      %p171 = scmp.eq.s32.totalorder %s30, 7
      %p172 = por %p170, %p171
      %p174 = scmp.ne.s32.totalorder %s159, %s173
      %p175 = scmp.eq.s32.totalorder %s30, 0
      %p176 = por %p174, %p175
      %s178 = sadd.s32 %s177, 1
      %p181 = scmp.eq.s32.totalorder %s24, 7
      %p182 = scmp.ne.s32.totalorder %s177, %s179
      %p183 = scmp.eq.s32.totalorder %s24, 0
      %p184 = por %p182, %p183
      %p185 = scmp.ne.s32.totalorder %s177, %s179
      %p186 = scmp.eq.s32.totalorder %s29, 7
      %p187 = por %p185, %p186
      %p188 = scmp.ne.s32.totalorder %s179, %s180
      %p189 = scmp.eq.s32.totalorder %s29, 0
      %p190 = por %p188, %p189
      %p191 = scmp.ne.s32.totalorder %s179, %s180
      %p192 = scmp.eq.s32.totalorder %s30, 7
      %p193 = por %p191, %p192
      %p195 = scmp.ne.s32.totalorder %s180, %s194
      %p196 = scmp.eq.s32.totalorder %s30, 0
      %p197 = por %p195, %p196
      %s199 = sadd.s32 %s198, 1
      %p202 = scmp.eq.s32.totalorder %s24, 7
      %p203 = scmp.ne.s32.totalorder %s198, %s200
      %p204 = scmp.eq.s32.totalorder %s24, 0
      %p205 = por %p203, %p204
      %p206 = scmp.ne.s32.totalorder %s198, %s200
      %p207 = scmp.eq.s32.totalorder %s29, 7
      %p208 = por %p206, %p207
      %p209 = scmp.ne.s32.totalorder %s200, %s201
      %p210 = scmp.eq.s32.totalorder %s29, 0
      %p211 = por %p209, %p210
      %p212 = scmp.ne.s32.totalorder %s200, %s201
      %p213 = scmp.eq.s32.totalorder %s30, 7
      %p214 = por %p212, %p213
      %p216 = scmp.ne.s32.totalorder %s201, %s215
      %p217 = scmp.eq.s32.totalorder %s30, 0
      %p218 = por %p216, %p217
      %s220 = sadd.s32 %s219, 1
      %p223 = scmp.eq.s32.totalorder %s24, 7
      %p224 = scmp.ne.s32.totalorder %s219, %s221
      %p225 = scmp.eq.s32.totalorder %s24, 0
      %p226 = por %p224, %p225
      %p227 = scmp.ne.s32.totalorder %s219, %s221
      %p228 = scmp.eq.s32.totalorder %s29, 7
      %p229 = por %p227, %p228
      %p230 = scmp.ne.s32.totalorder %s221, %s222
      %p231 = scmp.eq.s32.totalorder %s29, 0
      %p232 = por %p230, %p231
      %p233 = scmp.ne.s32.totalorder %s221, %s222
      %p234 = scmp.eq.s32.totalorder %s30, 7
      %p235 = por %p233, %p234
      %p237 = scmp.ne.s32.totalorder %s222, %s236
      %p238 = scmp.eq.s32.totalorder %s30, 0
      %p239 = por %p237, %p238
      %s241 = sadd.s32 %s240, 1
      %p244 = scmp.eq.s32.totalorder %s24, 7
      %p245 = scmp.ne.s32.totalorder %s240, %s242
      %p246 = scmp.eq.s32.totalorder %s24, 0
      %p247 = por %p245, %p246
      %p248 = scmp.ne.s32.totalorder %s240, %s242
      %p249 = scmp.eq.s32.totalorder %s29, 7
      %p250 = por %p248, %p249
      %p251 = scmp.ne.s32.totalorder %s242, %s243
      %p252 = scmp.eq.s32.totalorder %s29, 0
      %p253 = por %p251, %p252
      %p254 = scmp.ne.s32.totalorder %s242, %s243
      %p255 = scmp.eq.s32.totalorder %s30, 7
      %p256 = por %p254, %p255
      %p258 = scmp.ne.s32.totalorder %s243, %s257
      %p259 = scmp.eq.s32.totalorder %s30, 0
      %p260 = por %p258, %p259
      %s262 = sadd.s32 %s261, 1
      %p265 = scmp.eq.s32.totalorder %s24, 7
      %p266 = scmp.ne.s32.totalorder %s261, %s263
      %p267 = scmp.eq.s32.totalorder %s24, 0
      %p268 = por %p266, %p267
      %p269 = scmp.ne.s32.totalorder %s261, %s263
      %p270 = scmp.eq.s32.totalorder %s29, 7
      %p271 = por %p269, %p270
      %p272 = scmp.ne.s32.totalorder %s263, %s264
      %p273 = scmp.eq.s32.totalorder %s29, 0
      %p274 = por %p272, %p273
      %p275 = scmp.ne.s32.totalorder %s263, %s264
      %p276 = scmp.eq.s32.totalorder %s30, 7
      %p277 = por %p275, %p276
      %p279 = scmp.ne.s32.totalorder %s264, %s278
      %p280 = scmp.eq.s32.totalorder %s30, 0
      %p281 = por %p279, %p280
      %s283 = sadd.s32 %s282, 1
      %p286 = scmp.eq.s32.totalorder %s24, 7
      %p287 = scmp.ne.s32.totalorder %s282, %s284
      %p288 = scmp.eq.s32.totalorder %s24, 0
      %p289 = por %p287, %p288
      %p290 = scmp.ne.s32.totalorder %s282, %s284
      %p291 = scmp.eq.s32.totalorder %s29, 7
      %p292 = por %p290, %p291
      %p293 = scmp.ne.s32.totalorder %s284, %s285
      %p294 = scmp.eq.s32.totalorder %s29, 0
      %p295 = por %p293, %p294
      %p296 = scmp.ne.s32.totalorder %s284, %s285
      %p297 = scmp.eq.s32.totalorder %s30, 7
      %p298 = por %p296, %p297
      %p300 = scmp.ne.s32.totalorder %s285, %s299
      %p301 = scmp.eq.s32.totalorder %s30, 0
      %p302 = por %p300, %p301
      %s303 = ssub.s32 %s31, %s43
      %s304 = ssub.s32 %s32, %s39
      %s305 = sor.u32 %s303, %s304
      %p306 = scmp.eq.s32.totalorder %s305, 0
      %s308 = sadd.s32 %s307, 1
      %s309 = scalar_select %p306, %s307, %s308
      %p312 = pneg %p306
      %p313 = scmp.eq.s32.totalorder %s24, 7
      %p314 = por %p312, %p313
      %p315 = scmp.ne.s32.totalorder %s307, %s310
      %p316 = scmp.eq.s32.totalorder %s24, 0
      %p317 = por %p315, %p316
      %p318 = scmp.ne.s32.totalorder %s307, %s310
      %p319 = scmp.eq.s32.totalorder %s29, 7
      %p320 = por %p318, %p319
      %p321 = scmp.ne.s32.totalorder %s310, %s311
      %p322 = scmp.eq.s32.totalorder %s29, 0
      %p323 = por %p321, %p322
      %p324 = scmp.ne.s32.totalorder %s310, %s311
      %p325 = scmp.eq.s32.totalorder %s30, 7
      %p326 = por %p324, %p325
      %p328 = scmp.ne.s32.totalorder %s311, %s327
      %p329 = scmp.eq.s32.totalorder %s30, 0
      %p330 = por %p328, %p329
      %p331 = scmp.le.s32.totalorder 1, %s24
      %p332 = scmp.lt.s32.totalorder %s24, 9
      %p333 = pnand %p331, %p332
      %p334 = pneg %p333
      // Predicated region
      $region9: #{tpu_custom_call.1} parent=5 // pred_check
        _
      $region10: #{tpu_custom_call.1} parent=5 // pred_check_branch
        %336 = sbr.rel (%p333) target = $region12
      $region11: #{tpu_custom_call.1} parent=5 // pred_region
        %s337 = ssub.s32 %s24, 1
        // Predicated region
        $region13: #{tpu_custom_call.1} parent=11 // pred_check
          %p338 = pneg %p85
        $region14: #{tpu_custom_call.1} parent=11 // pred_check_branch
          %340 = sbr.rel (%p338) target = $region16
        $region15: #{tpu_custom_call.1} parent=11 // pred_region
          _
        $region16: #{tpu_custom_call.1} parent=11 // pred_fallthru
          _
        // Predicated region
        $region17: #{tpu_custom_call.1} parent=11 // pred_check
          %p341 = pneg %p106
        $region18: #{tpu_custom_call.1} parent=11 // pred_check_branch
          %343 = sbr.rel (%p341) target = $region20
        $region19: #{tpu_custom_call.1} parent=11 // pred_region
          _
        $region20: #{tpu_custom_call.1} parent=11 // pred_fallthru
          _
        // Predicated region
        $region21: #{tpu_custom_call.1} parent=11 // pred_check
          %p344 = pneg %p127
        $region22: #{tpu_custom_call.1} parent=11 // pred_check_branch
          %346 = sbr.rel (%p344) target = $region24
        $region23: #{tpu_custom_call.1} parent=11 // pred_region
          _
        $region24: #{tpu_custom_call.1} parent=11 // pred_fallthru
          _
        // Predicated region
        $region25: #{tpu_custom_call.1} parent=11 // pred_check
          %p347 = pneg %p148
        $region26: #{tpu_custom_call.1} parent=11 // pred_check_branch
          %349 = sbr.rel (%p347) target = $region28
        $region27: #{tpu_custom_call.1} parent=11 // pred_region
          _
        $region28: #{tpu_custom_call.1} parent=11 // pred_fallthru
          _
        // Predicated region
        $region29: #{tpu_custom_call.1} parent=11 // pred_check
          %p350 = pneg %p169
        $region30: #{tpu_custom_call.1} parent=11 // pred_check_branch
          %352 = sbr.rel (%p350) target = $region32
        $region31: #{tpu_custom_call.1} parent=11 // pred_region
          _
        $region32: #{tpu_custom_call.1} parent=11 // pred_fallthru
          _
        // Predicated region
        $region33: #{tpu_custom_call.1} parent=11 // pred_check
          %p353 = pneg %p190
        $region34: #{tpu_custom_call.1} parent=11 // pred_check_branch
          %355 = sbr.rel (%p353) target = $region36
        $region35: #{tpu_custom_call.1} parent=11 // pred_region
          _
        $region36: #{tpu_custom_call.1} parent=11 // pred_fallthru
          _
        // Predicated region
        $region37: #{tpu_custom_call.1} parent=11 // pred_check
          %p356 = pneg %p211
        $region38: #{tpu_custom_call.1} parent=11 // pred_check_branch
          %358 = sbr.rel (%p356) target = $region40
        $region39: #{tpu_custom_call.1} parent=11 // pred_region
          _
        $region40: #{tpu_custom_call.1} parent=11 // pred_fallthru
          _
        // Predicated region
        $region41: #{tpu_custom_call.1} parent=11 // pred_check
          %p359 = pneg %p232
        $region42: #{tpu_custom_call.1} parent=11 // pred_check_branch
          %361 = sbr.rel (%p359) target = $region44
        $region43: #{tpu_custom_call.1} parent=11 // pred_region
          _
        $region44: #{tpu_custom_call.1} parent=11 // pred_fallthru
          _
        // Predicated region
        $region45: #{tpu_custom_call.1} parent=11 // pred_check
          %p362 = pneg %p253
        $region46: #{tpu_custom_call.1} parent=11 // pred_check_branch
          %364 = sbr.rel (%p362) target = $region48
        $region47: #{tpu_custom_call.1} parent=11 // pred_region
          _
        $region48: #{tpu_custom_call.1} parent=11 // pred_fallthru
          _
        // Predicated region
        $region49: #{tpu_custom_call.1} parent=11 // pred_check
          %p365 = pneg %p274
        $region50: #{tpu_custom_call.1} parent=11 // pred_check_branch
          %367 = sbr.rel (%p365) target = $region52
        $region51: #{tpu_custom_call.1} parent=11 // pred_region
          _
        $region52: #{tpu_custom_call.1} parent=11 // pred_fallthru
          _
        // Predicated region
        $region53: #{tpu_custom_call.1} parent=11 // pred_check
          %p368 = pneg %p295
        $region54: #{tpu_custom_call.1} parent=11 // pred_check_branch
          %370 = sbr.rel (%p368) target = $region56
        $region55: #{tpu_custom_call.1} parent=11 // pred_region
          _
        $region56: #{tpu_custom_call.1} parent=11 // pred_fallthru
          _
      $region12: #{tpu_custom_call.1} parent=5 // pred_fallthru
        _
      %p371 = scmp.lt.s32.totalorder %s24, 8
      // Predicated region
      $region57: #{tpu_custom_call.1} parent=5 // pred_check
        %p372 = pneg %p371
      $region58: #{tpu_custom_call.1} parent=5 // pred_check_branch
        %374 = sbr.rel (%p372) target = $region60
      $region59: #{tpu_custom_call.1} parent=5 // pred_region
        // Predicated region
        $region61: #{tpu_custom_call.1} parent=59 // pred_check
          %p375 = pneg %p58
        $region62: #{tpu_custom_call.1} parent=59 // pred_check_branch
          %377 = sbr.rel (%p375) target = $region64
        $region63: #{tpu_custom_call.1} parent=59 // pred_region
          %s378 = sand.u32 %s48, 1
          %s379 = scalar_lea.sflag [#allocation3], %s378
          %s380 = sand.u32 %s48, 1
          %s381 = smul.addr %s380, 16
          %s382 = scalar_lea.vmem [#allocation2], %s381
          %s383 = smul.u32 2, %s32
          %s385 = ssub.s32 256, 256
          %386 = vsyncadd %s379, %s385
          %s387 = smul.addr %s31, 8
          %s388 = sadd.s32 %s383, %s387
          %s389 = smul.addr %s388, 128
          %s390 = scalar_lea.hbm %s0, %s389
          %s391 = sshll.u32 %s382, 4
          %s392 = int_to_ptr.vmem [resolvable:$true] %s391
          %397 = dma.hbm_to_vmem [thread:$0]  %s390, 256, %s392, %s379, 128, 128, 8
        $region64: #{tpu_custom_call.1} parent=59 // pred_fallthru
          _
      $region60: #{tpu_custom_call.1} parent=5 // pred_fallthru
        _
      %p398 = scmp.le.s32.totalorder 1, %s24
      %p399 = scmp.lt.s32.totalorder %s24, 9
      %p400 = pnand %p398, %p399
      %p401 = pneg %p400
      // Predicated region
      $region65: #{tpu_custom_call.1} parent=5 // pred_check
        _
      $region66: #{tpu_custom_call.1} parent=5 // pred_check_branch
        %403 = sbr.rel (%p400) target = $region68
      $region67: #{tpu_custom_call.1} parent=5 // pred_region
        %s404 = ssub.s32 %s24, 1
        %s405 = sand.u32 %s51, 1
        %s406 = scalar_lea.sflag [#allocation3], %s405
        %s407 = sand.u32 %s51, 1
        %s408 = smul.addr %s407, 16
        %s409 = scalar_lea.vmem [#allocation2], %s408
        // Predicated region
        $region69: #{tpu_custom_call.1} parent=67 // pred_check
          %p410 = pneg %p64
        $region70: #{tpu_custom_call.1} parent=67 // pred_check_branch
          %412 = sbr.rel (%p410) target = $region72
        $region71: #{tpu_custom_call.1} parent=67 // pred_region
          %413 = dma.done %s406, 256
        $region72: #{tpu_custom_call.1} parent=67 // pred_fallthru
          _
        %s414 = sand.u32 %s51, 1
        %s415 = scalar_lea.sflag [#allocation3], %s414
        %s416 = sand.u32 %s51, 1
        %s417 = smul.addr %s416, 16
        %s418 = scalar_lea.vmem [#allocation2], %s417
        %p419 = pneg %p64
        %p420 = pneg %p61
        %p421 = pneg %p85
        %p422 = pneg %p82
        %p423 = pneg %p106
        %p424 = pneg %p103
        %p425 = pneg %p127
        %p426 = pneg %p124
        %p427 = pneg %p148
        %p428 = pneg %p145
        %p429 = pneg %p169
        %p430 = pneg %p166
        %p431 = pneg %p190
        %p432 = pneg %p187
        %p433 = pneg %p211
        %p434 = pneg %p208
        %p435 = pneg %p232
        %p436 = pneg %p229
        %p437 = pneg %p253
        %p438 = pneg %p250
        %p439 = pneg %p274
        %p440 = pneg %p271
        %p441 = pneg %p295
        %p442 = pneg %p292
        %p443 = pneg %p323
        %p444 = pneg %p320
        %s445 = sand.u32 %s310, 1
        %s446 = scalar_lea.sflag [#allocation4], %s445
        %s447 = sand.u32 %s310, 1
        %s448 = smul.addr %s447, 16
        %s449 = scalar_lea.vmem [#allocation5], %s448
        %s450 = smul.u32 2, %s34
        %s451 = smul.u32 2, %s34
        %v452 = vld [vmem:[%s409] sm:$0xff]
        %v453 = vld [vmem:[%s409 + $0x8] sm:$0xff]
        %v454 = vld [vmem:[%s1] sm:$0xff]
        %v455 = vld [vmem:[%s1 + $0x8] sm:$0xff]
        %v456 = vld [vmem:[%s2] sm:$0x7]
        %v457 = vld [vmem:[%s3] sm:$0x1]
        %v458 = vrot.slane %v452, 7
        %v459 = vrot.slane %v453, 7
        %v460 = vlaneseq
        %v461 = vshrl.u32 %v460, 7
        %vm462 = vcmp.lt.s32.totalorder %v461, 1
        %v463 = vsel %vm462, %v458, %v459
        %v464 = vsel %vm462, %v459, %v458
        %466 = vset.pattern.permute.xlu0 0
        %467 = vperm.xlu0 %466, %v454
        %v468 = vpop.permute.xlu0 %467
        %471 = vset.pattern.permute.xlu0 0
        %472 = vperm.xlu0 %471, %v455
        %v473 = vpop.permute.xlu0 %472
        %v475 = vmul.f32 %v464, %v468
        %v476 = vmul.f32 %v463, %v473
        %v477 = vrot.slane %v452, 1
        %v478 = vrot.slane %v453, 1
        %vm479 = vcmp.lt.s32.totalorder %v461, 7
        %v480 = vsel %vm479, %v477, %v478
        %v481 = vsel %vm479, %v478, %v477
        %482 = vset.pattern.permute.xlu0 1
        %483 = vperm.xlu0 %482, %v454
        %v484 = vpop.permute.xlu0 %483
        %486 = vset.pattern.permute.xlu0 1
        %487 = vperm.xlu0 %486, %v455
        %v488 = vpop.permute.xlu0 %487
        %v490 = vmul.f32 %v480, %v484
        %v491 = vmul.f32 %v481, %v488
        %v492 = vlaneseq
        %v493 = vshrl.u32 %v492, 7
        %v494 = vsub.s32 0, %v493
        %v495 = vrot.slane %v456, %v494
        %v496 = vmul.f32 %v495, %v475
        %v497 = vmul.f32 %v495, %v476
        %v498 = vlaneseq
        %v499 = vshrl.u32 %v498, 7
        %v500 = vsub.s32 1, %v499
        %v501 = vrot.slane %v456, %v500
        %v502 = vmul.f32 %v501, %v452
        %v503 = vmul.f32 %v501, %v453
        %v504 = vadd.f32 %v496, %v502
        %v505 = vadd.f32 %v497, %v503
        %v506 = vlaneseq
        %v507 = vshrl.u32 %v506, 7
        %v508 = vsub.s32 2, %v507
        %v509 = vrot.slane %v456, %v508
        %v510 = vmul.f32 %v509, %v490
        %v511 = vmul.f32 %v509, %v491
        %v512 = vadd.f32 %v504, %v510
        %v513 = vadd.f32 %v505, %v511
        %v515 = vlaneseq
        %v516 = vshrl.u32 %v515, 7
        %v517 = vsub.s32 0, %v516
        %v518 = vrot.slane %v457, %v517
        %v520 = vadd.f32 %v512, %v518
        %v521 = vadd.f32 %v513, %v518
        %v522 = vmax.f32 %v520, 0.0
        %v523 = vmax.f32 %v521, 0.0
        %v524 = vld [vmem:[%s5] sm:$0x1]
        %v525 = vld [vmem:[%s6] sm:$0x1]
        %v526 = vld [vmem:[%s4] sm:$0xff]
        %v527 = vld [vmem:[%s4 + $0x8] sm:$0xff]
        %v528 = vld [vmem:[%s4 + $0x10] sm:$0xff]
        %v529 = vld [vmem:[%s4 + $0x18] sm:$0xff]
        %v530 = vld [vmem:[%s4 + $0x20] sm:$0xff]
        %v531 = vld [vmem:[%s4 + $0x28] sm:$0xff]
        %v532 = vld [vmem:[%s4 + $0x30] sm:$0xff]
        %v533 = vld [vmem:[%s4 + $0x38] sm:$0xff]
        %vm534 = vcmask 523264
        %v536 = vsel %vm534, %v522, 0
        %v539 = vsel %vm534, %v523, 0
        %541 = vmatprep.subr.mxu0 0.0
        %542 = vmatpush1.msra.mxu0 %v526
        %543 = vmatprep.subr.mxu0 0.0
        %544 = vmatpush1.msra.mxu0 %v527
        %545 = vmatprep.subr.mxu0 0.0
        %546 = vmatpush1.msra.mxu0 %v528
        %547 = vmatprep.subr.mxu0 0.0
        %548 = vmatpush1.msra.mxu0 %v529
        %549 = vmatprep.subr.mxu0 0.0
        %550 = vmatpush1.msra.mxu0 %v530
        %551 = vmatprep.subr.mxu0 0.0
        %552 = vmatpush1.msra.mxu0 %v531
        %553 = vmatprep.subr.mxu0 0.0
        %554 = vmatpush1.msra.mxu0 %v532
        %555 = vmatprep.subr.mxu0 0.0
        %556 = vmatpush1.msra.mxu0 %v533
        %557 = vmatprep.subr.mxu0 0.0
        %558 = vmatpush1.msra.mxu0 0.0
        %559 = vmatprep.subr.mxu0 0.0
        %560 = vmatpush1.msra.mxu0 0.0
        %561 = vmatprep.subr.mxu0 0.0
        %562 = vmatpush1.msra.mxu0 0.0
        %563 = vmatprep.subr.mxu0 0.0
        %564 = vmatpush1.msra.mxu0 0.0
        %565 = vmatprep.subr.mxu0 0.0
        %566 = vmatpush1.msra.mxu0 0.0
        %567 = vmatprep.subr.mxu0 0.0
        %568 = vmatpush1.msra.mxu0 0.0
        %569 = vmatprep.subr.mxu0 0.0
        %570 = vmatpush1.msra.mxu0 0.0
        %571 = vmatprep.subr.mxu0 0.0
        %572 = vmatpush1.msra.mxu0 0.0
        %573 = vmatprep.subr.mxu0 0.0
        %574 = vmatpush1.msra.mxu0 0.0
        %575 = vmatprep.subr.mxu0 0.0
        %576 = vmatpush1.msra.mxu0 0.0
        %577 = vmatprep.subr.mxu0 0.0
        %578 = vmatpush1.msra.mxu0 0.0
        %579 = vmatprep.subr.mxu0 0.0
        %580 = vmatpush1.msra.mxu0 0.0
        %581 = vmatprep.subr.mxu0 0.0
        %582 = vmatpush1.msra.mxu0 0.0
        %583 = vmatprep.subr.mxu0 0.0
        %584 = vmatpush1.msra.mxu0 0.0
        %585 = vmatprep.subr.mxu0 0.0
        %586 = vmatpush1.msra.mxu0 0.0
        %587 = vmatprep.subr.mxu0 0.0
        %588 = vmatpush1.msra.mxu0 0.0
        %589 = vmatprep.subr.mxu0 0.0
        %590 = vmatpush1.msra.mxu0 0.0
        %591 = vmatprep.subr.mxu0 0.0
        %592 = vmatpush1.msra.mxu0 0.0
        %593 = vmatprep.subr.mxu0 0.0
        %594 = vmatpush1.msra.mxu0 0.0
        %595 = vmatprep.subr.mxu0 0.0
        %596 = vmatpush1.msra.mxu0 0.0
        %597 = vmatprep.subr.mxu0 0.0
        %598 = vmatpush1.msra.mxu0 0.0
        %599 = vmatprep.subr.mxu0 0.0
        %600 = vmatpush1.msra.mxu0 0.0
        %601 = vmatprep.subr.mxu0 0.0
        %602 = vmatpush1.msra.mxu0 0.0
        %603 = vmatprep.subr.mxu0 0.0
        %604 = vmatpush1.msra.mxu0 0.0
        %605 = vmatprep.mubr.f32.mxu0 0.0
        %606 = vmatmul.mubr.f32.gmra.mrb[0].mxu0 %v536
        %v607 = vpop.f32.mrb[0].mxu0
        %v608 = vadd.f32 0.0, %v607
        %v609 = vpop.f32.mrb[0].mxu0
        %610 = vmatprep.mubr.f32.mxu0 0.0
        %611 = vmatmul.mubr.f32.gmra.mrb[0].mxu0 %v539
        %v612 = vpop.f32.mrb[0].mxu0
        %v613 = vadd.f32 0.0, %v612
        %v614 = vpop.f32.mrb[0].mxu0
        %615 = vdwg.mxu0
        %v617 = vlaneseq
        %v618 = vshrl.u32 %v617, 7
        %v619 = vsub.s32 0, %v618
        %v620 = vrot.slane %v524, %v619
        %v622 = vmul.f32 %v608, %v620
        %v623 = vmul.f32 %v613, %v620
        %v625 = vlaneseq
        %v626 = vshrl.u32 %v625, 7
        %v627 = vsub.s32 0, %v626
        %v628 = vrot.slane %v525, %v627
        %v630 = vadd.f32 %v622, %v628
        %v631 = vadd.f32 %v623, %v628
        %v632 = vmax.f32 %v630, 0.0
        %v633 = vmax.f32 %v631, 0.0
        %v634 = vld [vmem:[%s7] sm:$0x7]
        %v635 = vld [vmem:[%s8] sm:$0x1]
        %v636 = vrot.slane %v632, 6
        %v637 = vrot.slane %v633, 6
        %vm638 = vcmp.lt.s32.totalorder %v461, 2
        %v639 = vsel %vm638, %v636, %v637
        %v640 = vsel %vm638, %v637, %v636
        %641 = vset.pattern.permute.xlu0 2
        %642 = vperm.xlu0 %641, %v454
        %v643 = vpop.permute.xlu0 %642
        %645 = vset.pattern.permute.xlu0 2
        %646 = vperm.xlu0 %645, %v455
        %v647 = vpop.permute.xlu0 %646
        %v649 = vmul.f32 %v640, %v643
        %v650 = vmul.f32 %v639, %v647
        %v651 = vrot.slane %v632, 2
        %v652 = vrot.slane %v633, 2
        %vm653 = vcmp.lt.s32.totalorder %v461, 6
        %v654 = vsel %vm653, %v651, %v652
        %v655 = vsel %vm653, %v652, %v651
        %656 = vset.pattern.permute.xlu0 3
        %657 = vperm.xlu0 %656, %v454
        %v658 = vpop.permute.xlu0 %657
        %660 = vset.pattern.permute.xlu0 3
        %661 = vperm.xlu0 %660, %v455
        %v662 = vpop.permute.xlu0 %661
        %v664 = vmul.f32 %v654, %v658
        %v665 = vmul.f32 %v655, %v662
        %v666 = vlaneseq
        %v667 = vshrl.u32 %v666, 7
        %v668 = vsub.s32 0, %v667
        %v669 = vrot.slane %v634, %v668
        %v670 = vmul.f32 %v669, %v649
        %v671 = vmul.f32 %v669, %v650
        %v672 = vlaneseq
        %v673 = vshrl.u32 %v672, 7
        %v674 = vsub.s32 1, %v673
        %v675 = vrot.slane %v634, %v674
        %v676 = vmul.f32 %v675, %v632
        %v677 = vmul.f32 %v675, %v633
        %v678 = vadd.f32 %v670, %v676
        %v679 = vadd.f32 %v671, %v677
        %v680 = vlaneseq
        %v681 = vshrl.u32 %v680, 7
        %v682 = vsub.s32 2, %v681
        %v683 = vrot.slane %v634, %v682
        %v684 = vmul.f32 %v683, %v664
        %v685 = vmul.f32 %v683, %v665
        %v686 = vadd.f32 %v678, %v684
        %v687 = vadd.f32 %v679, %v685
        %v689 = vlaneseq
        %v690 = vshrl.u32 %v689, 7
        %v691 = vsub.s32 0, %v690
        %v692 = vrot.slane %v635, %v691
        %v694 = vadd.f32 %v686, %v692
        %v695 = vadd.f32 %v687, %v692
        %v696 = vmax.f32 %v694, 0.0
        %v697 = vmax.f32 %v695, 0.0
        %v698 = vld [vmem:[%s10] sm:$0x1]
        %v699 = vld [vmem:[%s11] sm:$0x1]
        %v700 = vld [vmem:[%s9] sm:$0xff]
        %v701 = vld [vmem:[%s9 + $0x8] sm:$0xff]
        %v702 = vld [vmem:[%s9 + $0x10] sm:$0xff]
        %v703 = vld [vmem:[%s9 + $0x18] sm:$0xff]
        %v704 = vld [vmem:[%s9 + $0x20] sm:$0xff]
        %v705 = vld [vmem:[%s9 + $0x28] sm:$0xff]
        %v706 = vld [vmem:[%s9 + $0x30] sm:$0xff]
        %v707 = vld [vmem:[%s9 + $0x38] sm:$0xff]
        %v709 = vsel %vm534, %v696, 0
        %v712 = vsel %vm534, %v697, 0
        %714 = vmatprep.subr.mxu0 0.0
        %715 = vmatpush1.msra.mxu0 %v700
        %716 = vmatprep.subr.mxu0 0.0
        %717 = vmatpush1.msra.mxu0 %v701
        %718 = vmatprep.subr.mxu0 0.0
        %719 = vmatpush1.msra.mxu0 %v702
        %720 = vmatprep.subr.mxu0 0.0
        %721 = vmatpush1.msra.mxu0 %v703
        %722 = vmatprep.subr.mxu0 0.0
        %723 = vmatpush1.msra.mxu0 %v704
        %724 = vmatprep.subr.mxu0 0.0
        %725 = vmatpush1.msra.mxu0 %v705
        %726 = vmatprep.subr.mxu0 0.0
        %727 = vmatpush1.msra.mxu0 %v706
        %728 = vmatprep.subr.mxu0 0.0
        %729 = vmatpush1.msra.mxu0 %v707
        %730 = vmatprep.subr.mxu0 0.0
        %731 = vmatpush1.msra.mxu0 0.0
        %732 = vmatprep.subr.mxu0 0.0
        %733 = vmatpush1.msra.mxu0 0.0
        %734 = vmatprep.subr.mxu0 0.0
        %735 = vmatpush1.msra.mxu0 0.0
        %736 = vmatprep.subr.mxu0 0.0
        %737 = vmatpush1.msra.mxu0 0.0
        %738 = vmatprep.subr.mxu0 0.0
        %739 = vmatpush1.msra.mxu0 0.0
        %740 = vmatprep.subr.mxu0 0.0
        %741 = vmatpush1.msra.mxu0 0.0
        %742 = vmatprep.subr.mxu0 0.0
        %743 = vmatpush1.msra.mxu0 0.0
        %744 = vmatprep.subr.mxu0 0.0
        %745 = vmatpush1.msra.mxu0 0.0
        %746 = vmatprep.subr.mxu0 0.0
        %747 = vmatpush1.msra.mxu0 0.0
        %748 = vmatprep.subr.mxu0 0.0
        %749 = vmatpush1.msra.mxu0 0.0
        %750 = vmatprep.subr.mxu0 0.0
        %751 = vmatpush1.msra.mxu0 0.0
        %752 = vmatprep.subr.mxu0 0.0
        %753 = vmatpush1.msra.mxu0 0.0
        %754 = vmatprep.subr.mxu0 0.0
        %755 = vmatpush1.msra.mxu0 0.0
        %756 = vmatprep.subr.mxu0 0.0
        %757 = vmatpush1.msra.mxu0 0.0
        %758 = vmatprep.subr.mxu0 0.0
        %759 = vmatpush1.msra.mxu0 0.0
        %760 = vmatprep.subr.mxu0 0.0
        %761 = vmatpush1.msra.mxu0 0.0
        %762 = vmatprep.subr.mxu0 0.0
        %763 = vmatpush1.msra.mxu0 0.0
        %764 = vmatprep.subr.mxu0 0.0
        %765 = vmatpush1.msra.mxu0 0.0
        %766 = vmatprep.subr.mxu0 0.0
        %767 = vmatpush1.msra.mxu0 0.0
        %768 = vmatprep.subr.mxu0 0.0
        %769 = vmatpush1.msra.mxu0 0.0
        %770 = vmatprep.subr.mxu0 0.0
        %771 = vmatpush1.msra.mxu0 0.0
        %772 = vmatprep.subr.mxu0 0.0
        %773 = vmatpush1.msra.mxu0 0.0
        %774 = vmatprep.subr.mxu0 0.0
        %775 = vmatpush1.msra.mxu0 0.0
        %776 = vmatprep.subr.mxu0 0.0
        %777 = vmatpush1.msra.mxu0 0.0
        %778 = vmatprep.mubr.f32.mxu0 0.0
        %779 = vmatmul.mubr.f32.gmra.mrb[0].mxu0 %v709
        %v780 = vpop.f32.mrb[0].mxu0
        %v781 = vadd.f32 0.0, %v780
        %v782 = vpop.f32.mrb[0].mxu0
        %783 = vmatprep.mubr.f32.mxu0 0.0
        %784 = vmatmul.mubr.f32.gmra.mrb[0].mxu0 %v712
        %v785 = vpop.f32.mrb[0].mxu0
        %v786 = vadd.f32 0.0, %v785
        %v787 = vpop.f32.mrb[0].mxu0
        %788 = vdwg.mxu0
        %v790 = vlaneseq
        %v791 = vshrl.u32 %v790, 7
        %v792 = vsub.s32 0, %v791
        %v793 = vrot.slane %v698, %v792
        %v795 = vmul.f32 %v781, %v793
        %v796 = vmul.f32 %v786, %v793
        %v798 = vlaneseq
        %v799 = vshrl.u32 %v798, 7
        %v800 = vsub.s32 0, %v799
        %v801 = vrot.slane %v699, %v800
        %v803 = vadd.f32 %v795, %v801
        %v804 = vadd.f32 %v796, %v801
        %v805 = vadd.f32 %v803, %v452
        %v806 = vadd.f32 %v804, %v453
        %v807 = vmax.f32 %v805, 0.0
        %v808 = vmax.f32 %v806, 0.0
        %809 = vst.msk [vmem:[%s449] sm:$0xff] %vm534, %v807
        %810 = vst.msk [vmem:[%s449 + $0x8] sm:$0xff] %vm534, %v808
        %s811 = sand.u32 %s310, 1
        %s812 = scalar_lea.sflag [#allocation4], %s811
        %s813 = sand.u32 %s310, 1
        %s814 = smul.addr %s813, 16
        %s815 = scalar_lea.vmem [#allocation5], %s814
        // Predicated region
        $region73: #{tpu_custom_call.1} parent=67 // pred_check
          %p816 = pneg %p320
        $region74: #{tpu_custom_call.1} parent=67 // pred_check_branch
          %818 = sbr.rel (%p816) target = $region76
        $region75: #{tpu_custom_call.1} parent=67 // pred_region
          %s819 = smul.u32 2, %s34
          %s821 = ssub.s32 256, 256
          %822 = vsyncadd %s812, %s821
          %s823 = smul.addr %s33, 8
          %s824 = sadd.s32 %s819, %s823
          %s825 = smul.addr %s824, 128
          %s826 = scalar_lea.hbm %s12, %s825
          %s827 = sshll.u32 %s815, 4
          %s828 = int_to_ptr.vmem [resolvable:$true] %s827
          %833 = dma.vmem_to_hbm [thread:$0]  %s828, 256, %s826, %s812, 128, 128, 8
        $region76: #{tpu_custom_call.1} parent=67 // pred_fallthru
          _
      $region68: #{tpu_custom_call.1} parent=5 // pred_fallthru
        _
      %p834 = scmp.le.s32.totalorder 2, %s24
      // Predicated region
      $region77: #{tpu_custom_call.1} parent=5 // pred_check
        %p835 = pneg %p834
      $region78: #{tpu_custom_call.1} parent=5 // pred_check_branch
        %837 = sbr.rel (%p835) target = $region80
      $region79: #{tpu_custom_call.1} parent=5 // pred_region
        %s838 = ssub.s32 %s24, 2
        // Predicated region
        $region81: #{tpu_custom_call.1} parent=79 // pred_check
          %p839 = pneg %p326
        $region82: #{tpu_custom_call.1} parent=79 // pred_check_branch
          %841 = sbr.rel (%p839) target = $region84
        $region83: #{tpu_custom_call.1} parent=79 // pred_region
          %s842 = sand.u32 %s311, 1
          %s843 = scalar_lea.sflag [#allocation4], %s842
          %s844 = sand.u32 %s311, 1
          %s845 = smul.addr %s844, 16
          %s846 = scalar_lea.vmem [#allocation5], %s845
          %847 = dma.done %s843, 256
        $region84: #{tpu_custom_call.1} parent=79 // pred_fallthru
          _
      $region80: #{tpu_custom_call.1} parent=5 // pred_fallthru
        _
    $region6: #{tpu_custom_call.1} parent=1 // loop_footer
      %s28 = sadd.s32 1, %s24
    $region7: #{tpu_custom_call.1} parent=1 // loop_footer_branch
      %23 = sbr.rel target = $region3
    $region8: #{tpu_custom_call.1} parent=1 // loop_exit
      _
    %848 = vsyncpa [#allocation3], 1
    %s849 = scalar_lea.sflag [#allocation3], 1
    %850 = vsyncpa %s849, 1
    %851 = vsyncpa [#allocation4], 1
    %s852 = scalar_lea.sflag [#allocation4], 1
    %853 = vsyncpa %s852, 1

</llo_original>
